<compile_context>
chip_gen: v7x
topology: tpu7x:2x2x1
jax: 0.10.0
libtpu: 0.0.40
codegen_flags: <defaults>
</compile_context>

<pallas_src>
import functools

import jax
import jax.numpy as jnp
from jax.experimental import pallas as pl
from jax.experimental.pallas import tpu as pltpu


def _layer_norm_kernel(x_ref, g_ref, b_ref, o_ref, *, epsilon):
    # x_ref: (tile_rows, F)   g_ref/b_ref: (1, F) f32   o_ref: (tile_rows, F)
    x = x_ref[...].astype(jnp.float32)
    feat = x.shape[-1]
    n = jnp.float32(feat)

    # Fused single-pass moments: both reductions come from the same vreg read.
    s1 = jnp.sum(x, axis=-1, keepdims=True)
    s2 = jnp.sum(x * x, axis=-1, keepdims=True)
    mean = s1 / n
    # torch.std default: UNBIASED estimator (divide by N-1). Intentionally
    # differs from torch.nn.LayerNorm (biased var, eps inside the sqrt).
    var = jnp.maximum(s2 - n * mean * mean, 0.0) / jnp.float32(feat - 1)
    std = jnp.sqrt(var)

    # Per-row reciprocal on the EUP (separate VLIW slot) instead of a
    # per-element VPU divide.
    inv = pl.reciprocal(std + jnp.float32(epsilon), approx=True)

    out = (x - mean) * inv * g_ref[...] + b_ref[...]
    o_ref[...] = out.astype(o_ref.dtype)


def _choose_tile_rows(rows, feat, itemsize, max_block_bytes=2 * 1024 * 1024):
    """Largest row tile whose input block stays under `max_block_bytes`.

    Keeping the native-dtype input block at <=2 MiB means
    2x(in) + 2x(out) double-buffers plus f32 compute temporaries fit
    comfortably inside a 32 MiB scoped-VMEM budget on every generation
    (v7x has only 64 MiB physical / 32 MiB scoped by default).
    """
    if rows <= 8:
        return rows  # block == full row extent, always a legal block shape
    sub = 8 if itemsize >= 4 else 16  # sublane packing: 8 for f32, 16 for bf16
    tr = max_block_bytes // max(1, feat * itemsize)
    tr = min(tr, 2048, rows)
    tr = max(sub, (tr // sub) * sub)
    return int(tr)


def layer_normalization(x, gamma, beta, epsilon=1e-08):
    """Layer norm over the last axis of x, matching the PyTorch module semantics.

    x:     (..., F)
    gamma: (F,)
    beta:  (F,)
    """
    orig_shape = x.shape
    feat = orig_shape[-1]
    if feat < 2:
        # torch.std with ddof=1 is undefined for a single element.
        raise ValueError("layer_normalization requires features >= 2")

    x2d = x.reshape(-1, feat)
    rows = x2d.shape[0]

    itemsize = jnp.dtype(x.dtype).itemsize
    tr = _choose_tile_rows(rows, feat, itemsize)
    grid = (pl.cdiv(rows, tr),)

    # Cast the (tiny) parameters to f32 once in the wrapper instead of
    # re-casting (1, F) on every grid step inside the kernel.
    g2d = gamma.reshape(1, feat).astype(jnp.float32)
    b2d = beta.reshape(1, feat).astype(jnp.float32)

    kernel = functools.partial(_layer_norm_kernel, epsilon=epsilon)

    out2d = pl.pallas_call(
        kernel,
        out_shape=jax.ShapeDtypeStruct((rows, feat), x.dtype),
        grid_spec=pltpu.PrefetchScalarGridSpec(
            num_scalar_prefetch=0,
            grid=grid,
            in_specs=[
                pl.BlockSpec((tr, feat), lambda i: (i, 0)),
                pl.BlockSpec((1, feat), lambda i: (0, 0)),
                pl.BlockSpec((1, feat), lambda i: (0, 0)),
            ],
            out_specs=pl.BlockSpec((tr, feat), lambda i: (i, 0)),
        ),
        compiler_params=pltpu.CompilerParams(
            dimension_semantics=("parallel",),   # shards rows across TCs on v7x
            vmem_limit_bytes=32 * 1024 * 1024,   # safe on v5e/v6e/v7x
        ),
    )(x2d, g2d, b2d)

    return out2d.reshape(orig_shape)


if __name__ == "__main__":
    # Small shapes consistent with the module: batch=2, seq=8, hidden(features)=32
    B, S, F = 2, 8, 32
    key = jax.random.PRNGKey(0)
    x = jax.random.normal(key, (B, S, F), dtype=jnp.float32)

    # Deterministic parameter init, as in the module __init__.
    gamma = jnp.ones((F,), dtype=jnp.float32)
    beta = jnp.zeros((F,), dtype=jnp.float32)

    out = layer_normalization(x, gamma, beta, epsilon=1e-08)
    jax.block_until_ready(out)

    # Sanity check against a pure-JAX reference (unbiased std, eps added to std).
    mean = jnp.mean(x, axis=-1, keepdims=True)
    std = jnp.sqrt(jnp.sum((x - mean) ** 2, axis=-1, keepdims=True) / (F - 1))
    ref = gamma * (x - mean) / (std + 1e-08) + beta
    # Tolerance accounts for the EUP approximate reciprocal used in-kernel.
    assert jnp.allclose(out, ref, atol=5e-3, rtol=5e-3), float(
        jnp.max(jnp.abs(out - ref))
    )

    print("KERNEL_OK")
</pallas_src>

<mosaic_0001>
module attributes {stable_mosaic.version = 11 : i64} {
  func.func @_layer_norm_kernel(%arg0: i32, %arg1: memref<16x32xf32, #tpu.memory_space<vmem>>, %arg2: memref<1x32xf32, #tpu.memory_space<vmem>>, %arg3: memref<1x32xf32, #tpu.memory_space<vmem>>, %arg4: memref<16x32xf32, #tpu.memory_space<vmem>>) attributes {dimension_semantics = [#tpu.dimension_semantics<parallel>], iteration_bounds = array<i64: 1>, scalar_prefetch = 0 : i64, scratch_operands = 0 : i64, tpu.core_type = #tpu.core_type<tc>, window_params = [{transform_indices = @transform_0, window_bounds = array<i64: 16, 32>}, {pipeline_mode = #tpu.pipeline_mode<synchronous>, transform_indices = @transform_1, window_bounds = array<i64: 1, 32>}, {pipeline_mode = #tpu.pipeline_mode<synchronous>, transform_indices = @transform_2, window_bounds = array<i64: 1, 32>}, {transform_indices = @transform_3, window_bounds = array<i64: 16, 32>}]} {
    %c0 = arith.constant 0 : index
    %c0_0 = arith.constant 0 : index
    %0 = vector.load %arg1[%c0, %c0_0] : memref<16x32xf32, #tpu.memory_space<vmem>>, vector<16x32xf32>
    %cst = arith.constant dense<0.000000e+00> : vector<16xf32>
    %1 = vector.multi_reduction <add>, %0, %cst [1] : vector<16x32xf32> to vector<16xf32>
    %2 = vector.shape_cast %1 : vector<16xf32> to vector<16x1xf32>
    %3 = arith.mulf %0, %0 : vector<16x32xf32>
    %cst_1 = arith.constant dense<0.000000e+00> : vector<16xf32>
    %4 = vector.multi_reduction <add>, %3, %cst_1 [1] : vector<16x32xf32> to vector<16xf32>
    %5 = vector.shape_cast %4 : vector<16xf32> to vector<16x1xf32>
    %cst_2 = arith.constant 3.200000e+01 : f32
    %6 = vector.broadcast %cst_2 : f32 to vector<16x1xf32>
    %7 = arith.divf %2, %6 : vector<16x1xf32>
    %cst_3 = arith.constant 3.200000e+01 : f32
    %8 = vector.broadcast %cst_3 : f32 to vector<16x1xf32>
    %9 = arith.mulf %8, %7 : vector<16x1xf32>
    %10 = arith.mulf %9, %7 : vector<16x1xf32>
    %11 = arith.subf %5, %10 : vector<16x1xf32>
    %cst_4 = arith.constant 0.000000e+00 : f32
    %12 = vector.broadcast %cst_4 : f32 to vector<16x1xf32>
    %13 = arith.maximumf %11, %12 : vector<16x1xf32>
    %cst_5 = arith.constant 3.100000e+01 : f32
    %14 = vector.broadcast %cst_5 : f32 to vector<16x1xf32>
    %15 = arith.divf %13, %14 : vector<16x1xf32>
    %16 = math.sqrt %15 : vector<16x1xf32>
    %cst_6 = arith.constant 9.99999993E-9 : f32
    %17 = vector.broadcast %cst_6 : f32 to vector<16x1xf32>
    %18 = arith.addf %16, %17 : vector<16x1xf32>
    %19 = tpu.reciprocal %18 {approx = true} : vector<16x1xf32> -> vector<16x1xf32>
    %20 = vector.broadcast %7 : vector<16x1xf32> to vector<16x32xf32>
    %21 = arith.subf %0, %20 : vector<16x32xf32>
    %22 = vector.broadcast %19 : vector<16x1xf32> to vector<16x32xf32>
    %23 = arith.mulf %21, %22 : vector<16x32xf32>
    %c0_7 = arith.constant 0 : index
    %c0_8 = arith.constant 0 : index
    %24 = vector.load %arg2[%c0_7, %c0_8] : memref<1x32xf32, #tpu.memory_space<vmem>>, vector<1x32xf32>
    %25 = vector.broadcast %24 : vector<1x32xf32> to vector<16x32xf32>
    %26 = arith.mulf %23, %25 : vector<16x32xf32>
    %c0_9 = arith.constant 0 : index
    %c0_10 = arith.constant 0 : index
    %27 = vector.load %arg3[%c0_9, %c0_10] : memref<1x32xf32, #tpu.memory_space<vmem>>, vector<1x32xf32>
    %28 = vector.broadcast %27 : vector<1x32xf32> to vector<16x32xf32>
    %29 = arith.addf %26, %28 : vector<16x32xf32>
    %c0_11 = arith.constant 0 : index
    %c0_12 = arith.constant 0 : index
    %30 = vector.load %arg4[%c0_11, %c0_12] : memref<16x32xf32, #tpu.memory_space<vmem>>, vector<16x32xf32>
    tpu.vector_store %arg4[%c0_11, %c0_12], %29 {strides = array<i32>} : memref<16x32xf32, #tpu.memory_space<vmem>>, vector<16x32xf32>,
    return
  }
  func.func @transform_0(%arg0: i32) -> (i32, i32) {
    %c0_i32 = arith.constant 0 : i32
    %c0_i32_0 = arith.constant 0 : i32
    return %arg0, %c0_i32 : i32, i32
  }
  func.func @transform_1(%arg0: i32) -> (i32, i32) {
    %c0_i32 = arith.constant 0 : i32
    %c0_i32_0 = arith.constant 0 : i32
    %c0_i32_1 = arith.constant 0 : i32
    return %c0_i32, %c0_i32_0 : i32, i32
  }
  func.func @transform_2(%arg0: i32) -> (i32, i32) {
    %c0_i32 = arith.constant 0 : i32
    %c0_i32_0 = arith.constant 0 : i32
    %c0_i32_1 = arith.constant 0 : i32
    return %c0_i32, %c0_i32_0 : i32, i32
  }
  func.func @transform_3(%arg0: i32) -> (i32, i32) {
    %c0_i32 = arith.constant 0 : i32
    %c0_i32_0 = arith.constant 0 : i32
    return %arg0, %c0_i32 : i32, i32
  }
}

</mosaic_0001>

<llo_original>
// kernel: tpu_custom_call.1
$region0: #{tpu_custom_call.1}
  #allocation0 [shape = 'u32[]', space=smem, size = 0x4, offset = 0x4, fixed_abs, tag = 'smem constant byte address 0x4 - core index']
  #allocation1 [shape = 'u32[144,128]{1,0:T(1,128)}', space=vmem, size = 0x12000, scoped, tag = 'internal scratch']
  %s0 = inlined_call_operand.hbm [shape: f32[16,32], index: 0, kind: input, shape index: {}]
  %s1 = inlined_call_operand.vmem [shape: f32[1,32], index: 1, kind: input, shape index: {}]
  %s2 = inlined_call_operand.vmem [shape: f32[1,32], index: 2, kind: input, shape index: {}]
  %s3 = inlined_call_operand.hbm [shape: f32[16,32], index: 3, kind: output, shape index: {}]
  %s4 = sld [smem:[#allocation0]]
  $region26: #{tpu_custom_call.1} parent=0
    _
  %s6 = ssub.s32 1, %s4
  %s7 = scalar_select 0, %s6, %s4
  $region1: #{tpu_custom_call.1} parent=0
    #allocation2 [shape = 'u8[8192]{0}', space=vmem, size = 0x2000, scoped, tag = 'input window, operand 0, single buffered']
    #allocation3 [shape = 's32[1]{0}', space=sflag, size = 0x4, scoped, tag = 'scoped memory for tpu_custom_call.1']
    #allocation4 [shape = 's32[1]{0}', space=sflag, size = 0x4, scoped, tag = 'scoped memory for tpu_custom_call.1']
    #allocation5 [shape = 'u8[8192]{0}', space=vmem, size = 0x2000, scoped, tag = 'output window, operand 0, single buffered']
    %8 = vsyncpa [#allocation3], 0
    %9 = vsyncpa [#allocation4], 0
    // Predicated region
    $region2: #{tpu_custom_call.1} parent=1 // pred_check
      _
    $region3: #{tpu_custom_call.1} parent=1 // pred_check_branch
      %11 = sbr.rel (0) target = $region5
    $region4: #{tpu_custom_call.1} parent=1 // pred_region
      %s13 = ssub.s32 256, 256
      %14 = vsyncadd [#allocation3], %s13
      %s15 = sshll.u32 [#allocation2], 4
      %s16 = int_to_ptr.vmem [resolvable:$true] %s15
      %21 = dma.hbm_to_vmem [thread:$0]  %s0, 256, %s16, [#allocation3], 128, 128, 8
    $region5: #{tpu_custom_call.1} parent=1 // pred_fallthru
      _
    // Predicated region
    $region6: #{tpu_custom_call.1} parent=1 // pred_check
      _
    $region7: #{tpu_custom_call.1} parent=1 // pred_check_branch
      %23 = sbr.rel (0) target = $region9
    $region8: #{tpu_custom_call.1} parent=1 // pred_region
      _
    $region9: #{tpu_custom_call.1} parent=1 // pred_fallthru
      _
    // Predicated region
    $region10: #{tpu_custom_call.1} parent=1 // pred_check
      _
    $region11: #{tpu_custom_call.1} parent=1 // pred_check_branch
      %25 = sbr.rel (0) target = $region13
    $region12: #{tpu_custom_call.1} parent=1 // pred_region
      _
    $region13: #{tpu_custom_call.1} parent=1 // pred_fallthru
      _
    // Predicated region
    $region14: #{tpu_custom_call.1} parent=1 // pred_check
      _
    $region15: #{tpu_custom_call.1} parent=1 // pred_check_branch
      %27 = sbr.rel (0) target = $region17
    $region16: #{tpu_custom_call.1} parent=1 // pred_region
      %28 = dma.done [#allocation3], 256
    $region17: #{tpu_custom_call.1} parent=1 // pred_fallthru
      _
    %v29 = vld [vmem:[#allocation2] sm:$0xff]
    %v30 = vld [vmem:[#allocation2 + $0x8] sm:$0xff]
    %vm31 = vcmask 261120
    %v32 = vsel %vm31, %v29, 0.0
    %33 = vadd.xlane.f32.xlu0 %v32
    %v34 = vpop.xlane.xlu0 %33
    %v35 = vsel %vm31, %v30, 0.0
    %36 = vadd.xlane.f32.xlu0 %v35
    %v37 = vpop.xlane.xlu0 %36
    %v38 = vmul.f32 %v29, %v29
    %v39 = vmul.f32 %v30, %v30
    %v40 = vsel %vm31, %v38, 0.0
    %41 = vadd.xlane.f32.xlu0 %v40
    %v42 = vpop.xlane.xlu0 %41
    %v43 = vsel %vm31, %v39, 0.0
    %44 = vadd.xlane.f32.xlu0 %v43
    %v45 = vpop.xlane.xlu0 %44
    %v46 = vrcp.pop 32.0
    %v47 = vmul.f32 %v34, %v46
    %v48 = vmul.f32 %v37, %v46
    %v49 = vmul.f32 %v47, 32.0
    %v50 = vmul.f32 %v48, 32.0
    %v51 = vmul.f32 %v49, %v47
    %v52 = vmul.f32 %v50, %v48
    %v53 = vsub.f32 %v42, %v51
    %v54 = vsub.f32 %v45, %v52
    %v55 = vmax.f32 %v53, 0.0
    %v56 = vmax.f32 %v54, 0.0
    %v57 = vrcp.pop 31.0
    %v58 = vmul.f32 %v55, %v57
    %v59 = vmul.f32 %v56, %v57
    %v60 = vrsqrt.pop %v58
    %v61 = vmul.f32 %v58, %v60
    %vm62 = vcmp.eq.f32.partialorder %v58, inf
    %v63 = vsel %vm62, %v58, %v61
    %vm64 = vcmp.eq.f32.partialorder %v58, 0.0
    %v65 = vand.u32 %v58, 2147483648
    %v66 = vsel %vm64, %v65, %v63
    %v67 = vrsqrt.pop %v59
    %v68 = vmul.f32 %v59, %v67
    %vm69 = vcmp.eq.f32.partialorder %v59, inf
    %v70 = vsel %vm69, %v59, %v68
    %vm71 = vcmp.eq.f32.partialorder %v59, 0.0
    %v72 = vand.u32 %v59, 2147483648
    %v73 = vsel %vm71, %v72, %v70
    %v74 = vadd.f32 %v66, 1e-08
    %v75 = vadd.f32 %v73, 1e-08
    %v76 = vrcp.pop %v74
    %v77 = vrcp.pop %v75
    %v78 = vsub.f32 %v29, %v47
    %v79 = vsub.f32 %v30, %v48
    %v80 = vmul.f32 %v78, %v76
    %v81 = vmul.f32 %v79, %v77
    %v82 = vld [vmem:[%s1] sm:$0x1]
    %v84 = vlaneseq
    %v85 = vshrl.u32 %v84, 7
    %v86 = vsub.s32 0, %v85
    %v87 = vrot.slane %v82, %v86
    %v89 = vmul.f32 %v80, %v87
    %v90 = vmul.f32 %v81, %v87
    %v91 = vld [vmem:[%s2] sm:$0x1]
    %v93 = vlaneseq
    %v94 = vshrl.u32 %v93, 7
    %v95 = vsub.s32 0, %v94
    %v96 = vrot.slane %v91, %v95
    %v98 = vadd.f32 %v89, %v96
    %v99 = vadd.f32 %v90, %v96
    %100 = vst.msk [vmem:[#allocation5] sm:$0xff] %vm31, %v98
    %101 = vst.msk [vmem:[#allocation5 + $0x8] sm:$0xff] %vm31, %v99
    // Predicated region
    $region18: #{tpu_custom_call.1} parent=1 // pred_check
      _
    $region19: #{tpu_custom_call.1} parent=1 // pred_check_branch
      %103 = sbr.rel (0) target = $region21
    $region20: #{tpu_custom_call.1} parent=1 // pred_region
      %s105 = ssub.s32 256, 256
      %106 = vsyncadd [#allocation4], %s105
      %s107 = sshll.u32 [#allocation5], 4
      %s108 = int_to_ptr.vmem [resolvable:$true] %s107
      %113 = dma.vmem_to_hbm [thread:$0]  %s108, 256, %s3, [#allocation4], 128, 128, 8
    $region21: #{tpu_custom_call.1} parent=1 // pred_fallthru
      _
    // Predicated region
    $region22: #{tpu_custom_call.1} parent=1 // pred_check
      _
    $region23: #{tpu_custom_call.1} parent=1 // pred_check_branch
      %115 = sbr.rel (0) target = $region25
    $region24: #{tpu_custom_call.1} parent=1 // pred_region
      %116 = dma.done [#allocation4], 256
    $region25: #{tpu_custom_call.1} parent=1 // pred_fallthru
      _
    %117 = vsyncpa [#allocation3], 1
    %118 = vsyncpa [#allocation4], 1

</llo_original>
